<compile_context>
chip_gen: v7x
topology: tpu7x:2x2x1
jax: 0.10.0
libtpu: 0.0.40
codegen_flags: <defaults>
</compile_context>

<pallas_src>
import jax
import jax.numpy as jnp
from jax.experimental import pallas as pl
from jax.experimental.pallas import tpu as pltpu

_LANES = 128              # vreg lane width; last dim must be a multiple of 128
_MAX_TILE_ROWS = 2048     # (2048, 128) f32 = 1 MiB per tile buffer
_SMALL_N = 1 << 16        # below this a fused XLA elementwise op is strictly faster
_TARGET_GRID_STEPS = 8    # aim for ~8 grid steps: pipelining + v7x dual-TC sharding


def _round_up(v, m):
    return -(-v // m) * m


def _linear_kernel(w_ref, b_ref, x_ref, o_ref):
    # w_ref / b_ref: (1,) SMEM scalars (scalar prefetch).
    # x_ref / o_ref: (tile_rows, 128) VMEM tiles.
    # Pure VPU multiply-add — no MXU for a 1x1 "contraction".
    o_ref[...] = (x_ref[...] * w_ref[0] + b_ref[0]).astype(o_ref.dtype)


def linear_forward(x, weight, bias, *, force_pallas=False):
    """Pallas TPU implementation of nn.Linear(1, 1).forward.

    x:      (N, 1)
    weight: (1, 1)   (out_features, in_features)
    bias:   (1,)
    returns (N, 1) in x.dtype
    """
    n = x.shape[0]
    out_dtype = x.dtype
    if n == 0:  # empty-batch guard
        return jnp.zeros((0, 1), dtype=out_dtype)

    w_scalar = weight.reshape(1).astype(jnp.float32)  # 32-bit SMEM scalar
    b_scalar = bias.reshape(1).astype(jnp.float32)

    # Keep the caller's float dtype end-to-end (bf16 stays bf16 -> half the HBM bytes).
    compute_dtype = out_dtype if jnp.issubdtype(out_dtype, jnp.floating) else jnp.float32

    # Tiny-N fast path: per-call overhead + wrapper pad/slice copies dwarf the kernel.
    if not force_pallas and n < _SMALL_N:
        y = x.astype(compute_dtype) * w_scalar[0] + b_scalar[0]
        return y.astype(out_dtype).reshape(n, 1)

    # ---- lane-dense (rows, 128) slab; pad only to the sublane multiple ----
    itemsize = jnp.dtype(compute_dtype).itemsize
    sublanes = 8 * (4 // itemsize)                    # 8 for f32, 16 for bf16
    rows = _round_up(pl.cdiv(n, _LANES), sublanes)
    pad = rows * _LANES - n
    x_flat = x.reshape(-1).astype(compute_dtype)
    if pad > 0:
        x_flat = jnp.pad(x_flat, (0, pad))
    x_slab = x_flat.reshape(rows, _LANES)

    # Tile size: ~_TARGET_GRID_STEPS steps, capped at 1 MiB tiles, never above rows.
    tile_rows = _round_up(max(rows // _TARGET_GRID_STEPS, 1), sublanes)
    tile_rows = max(sublanes, min(_MAX_TILE_ROWS, tile_rows, rows))
    grid = (pl.cdiv(rows, tile_rows),)                # trailing partial block is masked

    cost = pl.CostEstimate(
        flops=2 * rows * _LANES,
        transcendentals=0,
        bytes_accessed=2 * rows * _LANES * itemsize,
    )

    out_slab = pl.pallas_call(
        _linear_kernel,
        out_shape=jax.ShapeDtypeStruct((rows, _LANES), compute_dtype),
        grid_spec=pltpu.PrefetchScalarGridSpec(
            num_scalar_prefetch=2,                    # weight, bias -> SMEM scalars
            grid=grid,
            in_specs=[pl.BlockSpec((tile_rows, _LANES), lambda i, w, b: (i, 0))],
            out_specs=pl.BlockSpec((tile_rows, _LANES), lambda i, w, b: (i, 0)),
        ),
        compiler_params=pltpu.CompilerParams(
            dimension_semantics=("parallel",),
        ),
        cost_estimate=cost,
    )(w_scalar, b_scalar, x_slab)

    # Slice away padding and restore the (N, 1) nn.Linear output layout.
    return out_slab.reshape(-1)[:n].reshape(n, 1).astype(out_dtype)


if __name__ == "__main__":
    key = jax.random.PRNGKey(0)
    kx, kw, kb, kx2, kx3 = jax.random.split(key, 5)

    # Deterministic parameters (shapes from nn.Linear(1, 1)): W (1,1), b (1,)
    weight = jax.random.uniform(kw, (1, 1), dtype=jnp.float32, minval=-1.0, maxval=1.0)
    bias = jax.random.uniform(kb, (1,), dtype=jnp.float32, minval=-1.0, maxval=1.0)

    # Module's example value 4.0 plus a few extra rows (exercises the small-N fast path).
    x = jnp.concatenate(
        [jnp.array([[4.0]], dtype=jnp.float32),
         jax.random.normal(kx, (3, 1), dtype=jnp.float32)],
        axis=0,
    )  # (4, 1)
    y = linear_forward(x, weight, bias)
    jax.block_until_ready(y)
    y_ref = x @ weight.T + bias
    assert y.shape == y_ref.shape, (y.shape, y_ref.shape)
    assert jnp.allclose(y, y_ref, atol=1e-6), (y, y_ref)

    # Force the Pallas path: single padded block.
    x2 = jax.random.normal(kx2, (300, 1), dtype=jnp.float32)
    y2 = linear_forward(x2, weight, bias, force_pallas=True)
    jax.block_until_ready(y2)
    y2_ref = x2 @ weight.T + bias
    assert jnp.allclose(y2, y2_ref, atol=1e-6)

    # Force the Pallas path: multi-step grid with a masked trailing partial block.
    x3 = jax.random.normal(kx3, (9000, 1), dtype=jnp.float32)
    y3 = linear_forward(x3, weight, bias, force_pallas=True)
    jax.block_until_ready(y3)
    y3_ref = x3 @ weight.T + bias
    assert jnp.allclose(y3, y3_ref, atol=1e-6)

    print("KERNEL_OK")
</pallas_src>

<mosaic_0001>
module attributes {stable_mosaic.version = 11 : i64} {
  func.func @_linear_kernel(%arg0: i32, %arg1: memref<1xf32, #tpu.memory_space<smem>>, %arg2: memref<1xf32, #tpu.memory_space<smem>>, %arg3: memref<8x128xf32, #tpu.memory_space<vmem>>, %arg4: memref<8x128xf32, #tpu.memory_space<vmem>>) attributes {dimension_semantics = [#tpu.dimension_semantics<parallel>], iteration_bounds = array<i64: 1>, scalar_prefetch = 2 : i64, scratch_operands = 0 : i64, tpu.core_type = #tpu.core_type<tc>, window_params = [{transform_indices = @transform_0, window_bounds = array<i64: 8, 128>}, {transform_indices = @transform_1, window_bounds = array<i64: 8, 128>}]} {
    %c0 = arith.constant 0 : index
    %c0_0 = arith.constant 0 : index
    %0 = vector.load %arg3[%c0, %c0_0] : memref<8x128xf32, #tpu.memory_space<vmem>>, vector<8x128xf32>
    %c0_1 = arith.constant 0 : index
    %1 = memref.load %arg1[%c0_1] : memref<1xf32, #tpu.memory_space<smem>>
    %2 = vector.broadcast %1 : f32 to vector<8x128xf32>
    %3 = arith.mulf %0, %2 : vector<8x128xf32>
    %c0_2 = arith.constant 0 : index
    %4 = memref.load %arg2[%c0_2] : memref<1xf32, #tpu.memory_space<smem>>
    %5 = vector.broadcast %4 : f32 to vector<8x128xf32>
    %6 = arith.addf %3, %5 : vector<8x128xf32>
    %c0_3 = arith.constant 0 : index
    %c0_4 = arith.constant 0 : index
    %7 = vector.load %arg4[%c0_3, %c0_4] : memref<8x128xf32, #tpu.memory_space<vmem>>, vector<8x128xf32>
    tpu.vector_store %arg4[%c0_3, %c0_4], %6 {strides = array<i32>} : memref<8x128xf32, #tpu.memory_space<vmem>>, vector<8x128xf32>,
    return
  }
  func.func @transform_0(%arg0: i32, %arg1: memref<1xf32, #tpu.memory_space<smem>>, %arg2: memref<1xf32, #tpu.memory_space<smem>>) -> (i32, i32) {
    %c0_i32 = arith.constant 0 : i32
    %c0_i32_0 = arith.constant 0 : i32
    return %arg0, %c0_i32 : i32, i32
  }
  func.func @transform_1(%arg0: i32, %arg1: memref<1xf32, #tpu.memory_space<smem>>, %arg2: memref<1xf32, #tpu.memory_space<smem>>) -> (i32, i32) {
    %c0_i32 = arith.constant 0 : i32
    %c0_i32_0 = arith.constant 0 : i32
    return %arg0, %c0_i32 : i32, i32
  }
}

</mosaic_0001>

<llo_original>
// kernel: tpu_custom_call.1
$region0: #{tpu_custom_call.1}
  #allocation0 [shape = 'u32[]', space=smem, size = 0x4, offset = 0x4, fixed_abs, tag = 'smem constant byte address 0x4 - core index']
  #allocation1 [shape = 'u32[144,128]{1,0:T(1,128)}', space=vmem, size = 0x12000, scoped, tag = 'internal scratch']
  #allocation2 [shape = 's32[1]{0}', space=sflag, size = 0x4, scoped, tag = 'scoped memory for tpu_custom_call.1']
  #allocation3 [shape = 'f32[1]{0:T(128)S(6)}', space=smem, size = 0x200, scoped, tag = 'prefetched SMEM operand 0']
  #allocation4 [shape = 'f32[1]{0:T(128)S(6)}', space=smem, size = 0x200, scoped, tag = 'prefetched SMEM operand 1']
  %s0 = inlined_call_operand.<no memory space> [shape: f32[1], index: 0, kind: input, shape index: {}]
  %s1 = inlined_call_operand.<no memory space> [shape: f32[1], index: 1, kind: input, shape index: {}]
  %s2 = inlined_call_operand.hbm [shape: f32[8,128], index: 2, kind: input, shape index: {}]
  %s3 = inlined_call_operand.hbm [shape: f32[8,128], index: 3, kind: output, shape index: {}]
  %s4 = sld [smem:[#allocation0]]
  $region18: #{tpu_custom_call.1} parent=0
    _
  %s6 = ssub.s32 1, %s4
  %s7 = scalar_select 0, %s6, %s4
  %8 = sst [smem:[#allocation3]] %s0
  %9 = sst [smem:[#allocation4]] %s1
  $region1: #{tpu_custom_call.1} parent=0
    #allocation5 [shape = 'u8[4096]{0}', space=vmem, size = 0x1000, scoped, tag = 'input window, operand 2, single buffered']
    #allocation6 [shape = 's32[1]{0}', space=sflag, size = 0x4, scoped, tag = 'scoped memory for tpu_custom_call.1']
    #allocation7 [shape = 's32[1]{0}', space=sflag, size = 0x4, scoped, tag = 'scoped memory for tpu_custom_call.1']
    #allocation8 [shape = 'u8[4096]{0}', space=vmem, size = 0x1000, scoped, tag = 'output window, operand 0, single buffered']
    %10 = vsyncpa [#allocation6], 0
    %11 = vsyncpa [#allocation7], 0
    // Predicated region
    $region2: #{tpu_custom_call.1} parent=1 // pred_check
      _
    $region3: #{tpu_custom_call.1} parent=1 // pred_check_branch
      %13 = sbr.rel (0) target = $region5
    $region4: #{tpu_custom_call.1} parent=1 // pred_region
      %s15 = ssub.s32 128, 128
      %16 = vsyncadd [#allocation6], %s15
      %s18 = sshll.u32 [#allocation5], 4
      %s19 = int_to_ptr.vmem [resolvable:$true] %s18
      %21 = dma.hbm_to_vmem [thread:$0]  %s2, 128, %s19, [#allocation6]
    $region5: #{tpu_custom_call.1} parent=1 // pred_fallthru
      _
    // Predicated region
    $region6: #{tpu_custom_call.1} parent=1 // pred_check
      _
    $region7: #{tpu_custom_call.1} parent=1 // pred_check_branch
      %23 = sbr.rel (0) target = $region9
    $region8: #{tpu_custom_call.1} parent=1 // pred_region
      %24 = dma.done [#allocation6], 128
    $region9: #{tpu_custom_call.1} parent=1 // pred_fallthru
      _
    %v25 = vld [vmem:[#allocation5] sm:$0xff]
    %s26 = sld [smem:[#allocation3]]
    %v27 = vstv %s26
    %v28 = vmul.f32 %v25, %v27
    %s29 = sld [smem:[#allocation4]]
    %v30 = vstv %s29
    %v31 = vadd.f32 %v28, %v30
    %32 = vst [vmem:[#allocation8] sm:$0xff] %v31
    // Predicated region
    $region10: #{tpu_custom_call.1} parent=1 // pred_check
      _
    $region11: #{tpu_custom_call.1} parent=1 // pred_check_branch
      %34 = sbr.rel (0) target = $region13
    $region12: #{tpu_custom_call.1} parent=1 // pred_region
      %s36 = ssub.s32 128, 128
      %37 = vsyncadd [#allocation7], %s36
      %s39 = sshll.u32 [#allocation8], 4
      %s40 = int_to_ptr.vmem [resolvable:$true] %s39
      %42 = dma.vmem_to_hbm [thread:$0]  %s40, 128, %s3, [#allocation7]
    $region13: #{tpu_custom_call.1} parent=1 // pred_fallthru
      _
    // Predicated region
    $region14: #{tpu_custom_call.1} parent=1 // pred_check
      _
    $region15: #{tpu_custom_call.1} parent=1 // pred_check_branch
      %44 = sbr.rel (0) target = $region17
    $region16: #{tpu_custom_call.1} parent=1 // pred_region
      %45 = dma.done [#allocation7], 128
    $region17: #{tpu_custom_call.1} parent=1 // pred_fallthru
      _
    %46 = vsyncpa [#allocation6], 1
    %47 = vsyncpa [#allocation7], 1

</llo_original>
